<compile_context>
chip_gen: v5e
topology: v5e:2x2
jax: 0.10.0
libtpu: 0.0.40
codegen_flags: <defaults>
</compile_context>

<pallas_src>
import functools

import jax
import jax.numpy as jnp
import numpy as np
from jax.experimental import pallas as pl
from jax.experimental.pallas import tpu as pltpu


# ----------------------------------------------------------------------------
# Pallas kernel: fused 3-layer MLP forward on one (TB, *) batch tile
# ----------------------------------------------------------------------------
def _generator_kernel(x_ref, w1_ref, b1_ref, w2_ref, b2_ref, w3_ref, b3_ref,
                      o_ref):
    # Cast x to bf16 in-kernel (VPU), keep f32 accumulation on the MXU.
    x = x_ref[...].astype(jnp.bfloat16)
    # Layer 1: Linear(input_dim -> H) + Tanh (bias add + tanh in f32)
    h = jnp.dot(x, w1_ref[...], preferred_element_type=jnp.float32)
    h = jnp.tanh(h + b1_ref[...]).astype(jnp.bfloat16)
    # Layer 2: Linear(H -> H) + Tanh
    h = jnp.dot(h, w2_ref[...], preferred_element_type=jnp.float32)
    h = jnp.tanh(h + b2_ref[...]).astype(jnp.bfloat16)
    # Layer 3: Linear(H -> out_pad) (MXU-friendly 128-wide dot), then store
    # only the real output columns (narrow f32 writeback).
    o = jnp.dot(h, w3_ref[...], preferred_element_type=jnp.float32)
    o = o + b3_ref[...]
    o_ref[...] = o[:, : o_ref.shape[1]].astype(o_ref.dtype)


def generator_toy_forward(x, kparams, *, output_dim, block_b=1024):
    """Fused MLP forward. x: [B, input_dim] f32. Returns [B, output_dim] f32.

    kparams = (w1_bf16[in,H], b1_f32[1,H], w2_bf16[H,H], b2_f32[1,H],
               w3_bf16[H,out_pad], b3_f32[1,out_pad])  -- see to_kernel_params.
    """
    w1, b1, w2, b2, w3, b3 = kparams
    B, in_dim = x.shape
    H = w1.shape[1]
    out_pad = w3.shape[1]

    # --- batch tile: multiple of 8 sublanes, capped by the batch ---
    TB = min(block_b, B)
    TB = max(8, (TB // 8) * 8)
    # Guarantee >=2 grid steps when the batch allows it so v7x megacore
    # ("parallel") can shard the batch axis across both TensorCores.
    if pl.cdiv(B, TB) < 2 and B > 8:
        TB = max(8, (((B + 1) // 2 + 7) // 8) * 8)
    grid = (pl.cdiv(B, TB),)   # ragged last block handled by Pallas (no jnp.pad)

    # weights/biases: constant index_maps -> DMA'd once, VMEM-resident
    def const(shape):
        return pl.BlockSpec(shape, lambda i: (0,) * len(shape))

    itemsize = lambda a: int(a.size) * a.dtype.itemsize
    cost = pl.CostEstimate(
        flops=2 * B * (in_dim * H + H * H + H * out_pad),
        transcendentals=2 * B * H,
        bytes_accessed=(itemsize(x) + B * output_dim * 4
                        + sum(itemsize(a) for a in (w1, b1, w2, b2, w3, b3))),
    )

    out = pl.pallas_call(
        _generator_kernel,
        out_shape=jax.ShapeDtypeStruct((B, output_dim), jnp.float32),
        grid_spec=pl.GridSpec(
            grid=grid,
            in_specs=[
                pl.BlockSpec((TB, in_dim), lambda i: (i, 0)),
                const(w1.shape), const(b1.shape),
                const(w2.shape), const(b2.shape),
                const(w3.shape), const(b3.shape),
            ],
            out_specs=pl.BlockSpec((TB, output_dim), lambda i: (i, 0)),
        ),
        compiler_params=pltpu.CompilerParams(
            dimension_semantics=("parallel",)),
        cost_estimate=cost,
    )(x, w1, b1, w2, b2, w3, b3)
    return out


# ----------------------------------------------------------------------------
# Deterministic parameter init (mirrors torch.nn.init.orthogonal_ semantics)
# ----------------------------------------------------------------------------
def _orthogonal(key, out_features, in_features):
    """Orthogonal init like torch.nn.init.orthogonal_ for a (out, in) weight."""
    rows, cols = out_features, in_features
    a = jax.random.normal(key, (rows, cols), dtype=jnp.float32)
    if rows < cols:
        a = a.T
    q, r = jnp.linalg.qr(a)
    d = jnp.diag(r)
    q = q * jnp.where(d >= 0, 1.0, -1.0)
    if rows < cols:
        q = q.T
    return q  # shape (out, in)


def init_generator_params(key, input_dim, n_hidden, n_layer, output_dim):
    """f32 master parameters, [in, out] layout (transposed from PyTorch)."""
    H = n_hidden * n_layer
    k1, k2, k3, kb1, kb2, kb3 = jax.random.split(key, 6)

    w1 = _orthogonal(k1, H, input_dim).T       # [input_dim, H]
    w2 = _orthogonal(k2, H, H).T               # [H, H]
    w3 = _orthogonal(k3, output_dim, H).T      # [H, output_dim]

    def bias(k, fan_in, n):
        bound = 1.0 / np.sqrt(fan_in)
        return jax.random.uniform(k, (1, n), jnp.float32, -bound, bound)

    b1 = bias(kb1, input_dim, H)               # [1, H]
    b2 = bias(kb2, H, H)                       # [1, H]
    b3 = bias(kb3, H, output_dim)              # [1, output_dim]
    return (w1, b1, w2, b2, w3, b3)


def to_kernel_params(params, lane_pad=128):
    """One-time conversion: bf16 weights, lane-pad the final layer to 128."""
    w1, b1, w2, b2, w3, b3 = params
    H, out_dim = w3.shape
    pad = max(lane_pad, out_dim)
    w3p = jnp.zeros((H, pad), jnp.float32).at[:, :out_dim].set(w3)
    b3p = jnp.zeros((1, pad), jnp.float32).at[:, :out_dim].set(b3)
    return (w1.astype(jnp.bfloat16), b1,
            w2.astype(jnp.bfloat16), b2,
            w3p.astype(jnp.bfloat16), b3p)


# ----------------------------------------------------------------------------
# Pure-JAX f32 reference for correctness check
# ----------------------------------------------------------------------------
def reference_forward(x, params):
    w1, b1, w2, b2, w3, b3 = params
    h = jnp.tanh(x @ w1 + b1)
    h = jnp.tanh(h @ w2 + b2)
    return h @ w3 + b3


if __name__ == "__main__":
    # Small shapes consistent with the module's forward (x: [B, input_dim]).
    # B deliberately NOT a tile multiple -> exercises the ragged last block,
    # and the >=2-step logic exercises the multi-step / megacore path.
    B = 200
    input_dim = 128
    n_hidden = 64
    n_layer = 2          # hidden width H = 128
    output_dim = 2

    key = jax.random.PRNGKey(0)
    kx, kp = jax.random.split(key)
    x = jax.random.normal(kx, (B, input_dim), dtype=jnp.float32)
    params = init_generator_params(kp, input_dim, n_hidden, n_layer, output_dim)
    kparams = to_kernel_params(params)   # bf16 weight conversion done ONCE here

    fwd = jax.jit(functools.partial(generator_toy_forward,
                                    output_dim=output_dim,
                                    block_b=1024))
    y = fwd(x, kparams)
    y = jax.block_until_ready(y)

    y_ref = reference_forward(x, params)
    # bf16 MXU operands (f32 accumulate, f32 tanh/bias/output) vs f32 ref
    np.testing.assert_allclose(np.asarray(y), np.asarray(y_ref),
                               rtol=2e-2, atol=2e-2)
    assert y.shape == (B, output_dim)
    print("KERNEL_OK")
</pallas_src>

<mosaic_0001>
module attributes {stable_mosaic.version = 11 : i64} {
  func.func @_generator_kernel(%arg0: i32, %arg1: memref<104x128xf32, #tpu.memory_space<vmem>>, %arg2: memref<128x128xbf16, #tpu.memory_space<vmem>>, %arg3: memref<1x128xf32, #tpu.memory_space<vmem>>, %arg4: memref<128x128xbf16, #tpu.memory_space<vmem>>, %arg5: memref<1x128xf32, #tpu.memory_space<vmem>>, %arg6: memref<128x128xbf16, #tpu.memory_space<vmem>>, %arg7: memref<1x128xf32, #tpu.memory_space<vmem>>, %arg8: memref<104x2xf32, #tpu.memory_space<vmem>>) attributes {dimension_semantics = [#tpu.dimension_semantics<parallel>], iteration_bounds = array<i64: 2>, scalar_prefetch = 0 : i64, scratch_operands = 0 : i64, tpu.core_type = #tpu.core_type<tc>, window_params = [{transform_indices = @transform_0, window_bounds = array<i64: 104, 128>}, {pipeline_mode = #tpu.pipeline_mode<synchronous>, transform_indices = @transform_1, window_bounds = array<i64: 128, 128>}, {pipeline_mode = #tpu.pipeline_mode<synchronous>, transform_indices = @transform_2, window_bounds = array<i64: 1, 128>}, {pipeline_mode = #tpu.pipeline_mode<synchronous>, transform_indices = @transform_3, window_bounds = array<i64: 128, 128>}, {pipeline_mode = #tpu.pipeline_mode<synchronous>, transform_indices = @transform_4, window_bounds = array<i64: 1, 128>}, {pipeline_mode = #tpu.pipeline_mode<synchronous>, transform_indices = @transform_5, window_bounds = array<i64: 128, 128>}, {pipeline_mode = #tpu.pipeline_mode<synchronous>, transform_indices = @transform_6, window_bounds = array<i64: 1, 128>}, {transform_indices = @transform_7, window_bounds = array<i64: 104, 2>}]} {
    %c0 = arith.constant 0 : index
    %c0_0 = arith.constant 0 : index
    %0 = vector.load %arg1[%c0, %c0_0] : memref<104x128xf32, #tpu.memory_space<vmem>>, vector<104x128xf32>
    %1 = arith.truncf %0 : vector<104x128xf32> to vector<104x128xbf16>
    %c0_1 = arith.constant 0 : index
    %c0_2 = arith.constant 0 : index
    %2 = vector.load %arg2[%c0_1, %c0_2] : memref<128x128xbf16, #tpu.memory_space<vmem>>, vector<128x128xbf16>
    %cst = arith.constant dense<0.000000e+00> : vector<104x128xf32>
    %3 = tpu.matmul %1, %2, %cst {dimension_numbers = #tpu.dot_dimension_numbers<[1], [0], [0], [1], [0, 0, 1, 1], [], []>} : vector<104x128xbf16>, vector<128x128xbf16>, vector<104x128xf32> -> vector<104x128xf32>
    %c0_3 = arith.constant 0 : index
    %c0_4 = arith.constant 0 : index
    %4 = vector.load %arg3[%c0_3, %c0_4] : memref<1x128xf32, #tpu.memory_space<vmem>>, vector<1x128xf32>
    %5 = vector.broadcast %4 : vector<1x128xf32> to vector<104x128xf32>
    %6 = arith.addf %3, %5 : vector<104x128xf32>
    %7 = math.tanh %6 : vector<104x128xf32>
    %8 = arith.truncf %7 : vector<104x128xf32> to vector<104x128xbf16>
    %c0_5 = arith.constant 0 : index
    %c0_6 = arith.constant 0 : index
    %9 = vector.load %arg4[%c0_5, %c0_6] : memref<128x128xbf16, #tpu.memory_space<vmem>>, vector<128x128xbf16>
    %cst_7 = arith.constant dense<0.000000e+00> : vector<104x128xf32>
    %10 = tpu.matmul %8, %9, %cst_7 {dimension_numbers = #tpu.dot_dimension_numbers<[1], [0], [0], [1], [0, 0, 1, 1], [], []>} : vector<104x128xbf16>, vector<128x128xbf16>, vector<104x128xf32> -> vector<104x128xf32>
    %c0_8 = arith.constant 0 : index
    %c0_9 = arith.constant 0 : index
    %11 = vector.load %arg5[%c0_8, %c0_9] : memref<1x128xf32, #tpu.memory_space<vmem>>, vector<1x128xf32>
    %12 = vector.broadcast %11 : vector<1x128xf32> to vector<104x128xf32>
    %13 = arith.addf %10, %12 : vector<104x128xf32>
    %14 = math.tanh %13 : vector<104x128xf32>
    %15 = arith.truncf %14 : vector<104x128xf32> to vector<104x128xbf16>
    %c0_10 = arith.constant 0 : index
    %c0_11 = arith.constant 0 : index
    %16 = vector.load %arg6[%c0_10, %c0_11] : memref<128x128xbf16, #tpu.memory_space<vmem>>, vector<128x128xbf16>
    %cst_12 = arith.constant dense<0.000000e+00> : vector<104x128xf32>
    %17 = tpu.matmul %15, %16, %cst_12 {dimension_numbers = #tpu.dot_dimension_numbers<[1], [0], [0], [1], [0, 0, 1, 1], [], []>} : vector<104x128xbf16>, vector<128x128xbf16>, vector<104x128xf32> -> vector<104x128xf32>
    %c0_13 = arith.constant 0 : index
    %c0_14 = arith.constant 0 : index
    %18 = vector.load %arg7[%c0_13, %c0_14] : memref<1x128xf32, #tpu.memory_space<vmem>>, vector<1x128xf32>
    %19 = vector.broadcast %18 : vector<1x128xf32> to vector<104x128xf32>
    %20 = arith.addf %17, %19 : vector<104x128xf32>
    %21 = vector.extract_strided_slice %20 {offsets = [0, 0], sizes = [104, 2], strides = [1, 1]} : vector<104x128xf32> to vector<104x2xf32>
    %c0_15 = arith.constant 0 : index
    %c0_16 = arith.constant 0 : index
    %22 = vector.load %arg8[%c0_15, %c0_16] : memref<104x2xf32, #tpu.memory_space<vmem>>, vector<104x2xf32>
    tpu.vector_store %arg8[%c0_15, %c0_16], %21 {strides = array<i32>} : memref<104x2xf32, #tpu.memory_space<vmem>>, vector<104x2xf32>,
    return
  }
  func.func @transform_0(%arg0: i32) -> (i32, i32) {
    %c0_i32 = arith.constant 0 : i32
    %c0_i32_0 = arith.constant 0 : i32
    return %arg0, %c0_i32 : i32, i32
  }
  func.func @transform_1(%arg0: i32) -> (i32, i32) {
    %c0_i32 = arith.constant 0 : i32
    %c0_i32_0 = arith.constant 0 : i32
    %c0_i32_1 = arith.constant 0 : i32
    return %c0_i32, %c0_i32_0 : i32, i32
  }
  func.func @transform_2(%arg0: i32) -> (i32, i32) {
    %c0_i32 = arith.constant 0 : i32
    %c0_i32_0 = arith.constant 0 : i32
    %c0_i32_1 = arith.constant 0 : i32
    return %c0_i32, %c0_i32_0 : i32, i32
  }
  func.func @transform_3(%arg0: i32) -> (i32, i32) {
    %c0_i32 = arith.constant 0 : i32
    %c0_i32_0 = arith.constant 0 : i32
    %c0_i32_1 = arith.constant 0 : i32
    return %c0_i32, %c0_i32_0 : i32, i32
  }
  func.func @transform_4(%arg0: i32) -> (i32, i32) {
    %c0_i32 = arith.constant 0 : i32
    %c0_i32_0 = arith.constant 0 : i32
    %c0_i32_1 = arith.constant 0 : i32
    return %c0_i32, %c0_i32_0 : i32, i32
  }
  func.func @transform_5(%arg0: i32) -> (i32, i32) {
    %c0_i32 = arith.constant 0 : i32
    %c0_i32_0 = arith.constant 0 : i32
    %c0_i32_1 = arith.constant 0 : i32
    return %c0_i32, %c0_i32_0 : i32, i32
  }
  func.func @transform_6(%arg0: i32) -> (i32, i32) {
    %c0_i32 = arith.constant 0 : i32
    %c0_i32_0 = arith.constant 0 : i32
    %c0_i32_1 = arith.constant 0 : i32
    return %c0_i32, %c0_i32_0 : i32, i32
  }
  func.func @transform_7(%arg0: i32) -> (i32, i32) {
    %c0_i32 = arith.constant 0 : i32
    %c0_i32_0 = arith.constant 0 : i32
    return %arg0, %c0_i32 : i32, i32
  }
}

</mosaic_0001>

<llo_original>
// kernel: generator_toy_forward.1
$region0: #{generator_toy_forward.1}
  #allocation0 [shape = 'u32[]', space=smem, size = 0x4, offset = 0x4, fixed_abs, tag = 'smem constant byte address 0x4 - core index']
  #allocation1 [shape = 'u32[72,128]{1,0:T(1,128)}', space=vmem, size = 0x9000, scoped, tag = 'internal scratch']
  %s0 = inlined_call_operand.hbm [shape: f32[200,128], index: 0, kind: input, shape index: {}]
  %s1 = inlined_call_operand.hbm [shape: bf16[128,128], index: 1, kind: input, shape index: {}]
  %s2 = inlined_call_operand.vmem [shape: f32[1,128], index: 2, kind: input, shape index: {}]
  %s3 = inlined_call_operand.hbm [shape: bf16[128,128], index: 3, kind: input, shape index: {}]
  %s4 = inlined_call_operand.vmem [shape: f32[1,128], index: 4, kind: input, shape index: {}]
  %s5 = inlined_call_operand.hbm [shape: bf16[128,128], index: 5, kind: input, shape index: {}]
  %s6 = inlined_call_operand.vmem [shape: f32[1,128], index: 6, kind: input, shape index: {}]
  %s7 = inlined_call_operand.vmem [shape: f32[200,2], index: 7, kind: output, shape index: {}]
  %s8 = sld [smem:[#allocation0]]
  $region125: #{generator_toy_forward.1} parent=0
    _
  %s10 = ssub.s32 1, %s8
  %s11 = scalar_select 0, %s10, %s8
  $region1: #{generator_toy_forward.1} parent=0
    #allocation2 [shape = 'u8[106496]{0}', space=vmem, size = 0x1a000, scoped, tag = 'input window, operand 0']
    #allocation3 [shape = 's32[2]{0}', space=sflag, size = 0x8, scoped, tag = 'scoped memory for generator_toy_forward.1']
    #allocation4 [shape = 'u8[32768]{0}', space=vmem, size = 0x8000, scoped, tag = 'input window, operand 1, single buffered']
    #allocation5 [shape = 's32[1]{0}', space=sflag, size = 0x4, scoped, tag = 'scoped memory for generator_toy_forward.1']
    #allocation6 [shape = 'u8[32768]{0}', space=vmem, size = 0x8000, scoped, tag = 'input window, operand 3, single buffered']
    #allocation7 [shape = 'u8[32768]{0}', space=vmem, size = 0x8000, scoped, tag = 'input window, operand 5, single buffered']
    #allocation8 [shape = 's32[1]{0}', space=sflag, size = 0x4, scoped, tag = 'scoped memory for generator_toy_forward.1']
    #allocation9 [shape = 'u8[106496]{0}', space=vmem, size = 0x1a000, scoped, tag = 'output window, operand 0']
    %12 = vsyncpa [#allocation3], 0
    %s13 = scalar_lea.sflag [#allocation3], 1
    %14 = vsyncpa %s13, 0
    %15 = vsyncpa [#allocation5], 0
    %16 = vsyncpa [#allocation8], 0
    loop: start=0, step=1, limit=4
    $region2: #{generator_toy_forward.1} parent=1 // loop_pre_header
      _
    $region3: #{generator_toy_forward.1} parent=1 // loop_header
      %s18 = sphi 0, %s22
      %p19 = scmp.ge.s32.totalorder %s18, 4
      %s28 = sphi 0, %s30
      %s31 = sphi 0, %s28
      %s32 = sphi 0, %s31
      %s48 = sphi 0, %s32
      %s52 = sphi 0, %s52
      %s54 = sphi 0, %s52
      %s55 = sphi 0, %s54
      %s69 = sphi 0, %s55
      %s73 = sphi 0, %s73
      %s75 = sphi 0, %s73
      %s76 = sphi 0, %s75
      %s90 = sphi 0, %s76
      %s94 = sphi 0, %s94
      %s96 = sphi 0, %s94
      %s97 = sphi 0, %s96
      %s111 = sphi 0, %s97
      %s115 = sphi 0, %s115
      %s117 = sphi 0, %s115
      %s118 = sphi 0, %s117
      %s132 = sphi 0, %s118
      %s136 = sphi 0, %s136
      %s138 = sphi 0, %s136
      %s139 = sphi 0, %s138
      %s153 = sphi 0, %s139
      %s157 = sphi 0, %s157
      %s159 = sphi 0, %s157
      %s160 = sphi 0, %s159
      %s174 = sphi 0, %s160
      %s180 = sphi 0, %s182
      %s183 = sphi 0, %s180
      %s184 = sphi 0, %s183
      %s200 = sphi 0, %s184
    $region4: #{generator_toy_forward.1} parent=1 // loop_header_branch
      %21 = sbr.rel (%p19) target = $region8
    $region5: #{generator_toy_forward.1} parent=1 // loop_body
      %s23 = ssub.s32 %s18, 1
      %s24 = ssub.s32 %s18, 2
      %s25 = sadd.s32 %s18, 1
      %s26 = ssub.s32 %s18, %s25
      %p27 = scmp.eq.s32.totalorder %s26, 0
      %s29 = sadd.s32 %s28, 1
      %s30 = scalar_select %p27, %s28, %s29
      %p33 = pneg %p27
      %p34 = scmp.eq.s32.totalorder %s18, 1
      %p35 = por %p33, %p34
      %p36 = scmp.ne.s32.totalorder %s28, %s31
      %p37 = scmp.eq.s32.totalorder %s18, 0
      %p38 = por %p36, %p37
      %p39 = scmp.ne.s32.totalorder %s28, %s31
      %p40 = scmp.eq.s32.totalorder %s23, 1
      %p41 = por %p39, %p40
      %p42 = scmp.ne.s32.totalorder %s31, %s32
      %p43 = scmp.eq.s32.totalorder %s23, 0
      %p44 = por %p42, %p43
      %p45 = scmp.ne.s32.totalorder %s31, %s32
      %p46 = scmp.eq.s32.totalorder %s24, 1
      %p47 = por %p45, %p46
      %p49 = scmp.ne.s32.totalorder %s32, %s48
      %p50 = scmp.eq.s32.totalorder %s24, 0
      %p51 = por %p49, %p50
      %s53 = sadd.s32 %s52, 1
      %p56 = scmp.eq.s32.totalorder %s18, 1
      %p57 = scmp.ne.s32.totalorder %s52, %s54
      %p58 = scmp.eq.s32.totalorder %s18, 0
      %p59 = por %p57, %p58
      %p60 = scmp.ne.s32.totalorder %s52, %s54
      %p61 = scmp.eq.s32.totalorder %s23, 1
      %p62 = por %p60, %p61
      %p63 = scmp.ne.s32.totalorder %s54, %s55
      %p64 = scmp.eq.s32.totalorder %s23, 0
      %p65 = por %p63, %p64
      %p66 = scmp.ne.s32.totalorder %s54, %s55
      %p67 = scmp.eq.s32.totalorder %s24, 1
      %p68 = por %p66, %p67
      %p70 = scmp.ne.s32.totalorder %s55, %s69
      %p71 = scmp.eq.s32.totalorder %s24, 0
      %p72 = por %p70, %p71
      %s74 = sadd.s32 %s73, 1
      %p77 = scmp.eq.s32.totalorder %s18, 1
      %p78 = scmp.ne.s32.totalorder %s73, %s75
      %p79 = scmp.eq.s32.totalorder %s18, 0
      %p80 = por %p78, %p79
      %p81 = scmp.ne.s32.totalorder %s73, %s75
      %p82 = scmp.eq.s32.totalorder %s23, 1
      %p83 = por %p81, %p82
      %p84 = scmp.ne.s32.totalorder %s75, %s76
      %p85 = scmp.eq.s32.totalorder %s23, 0
      %p86 = por %p84, %p85
      %p87 = scmp.ne.s32.totalorder %s75, %s76
      %p88 = scmp.eq.s32.totalorder %s24, 1
      %p89 = por %p87, %p88
      %p91 = scmp.ne.s32.totalorder %s76, %s90
      %p92 = scmp.eq.s32.totalorder %s24, 0
      %p93 = por %p91, %p92
      %s95 = sadd.s32 %s94, 1
      %p98 = scmp.eq.s32.totalorder %s18, 1
      %p99 = scmp.ne.s32.totalorder %s94, %s96
      %p100 = scmp.eq.s32.totalorder %s18, 0
      %p101 = por %p99, %p100
      %p102 = scmp.ne.s32.totalorder %s94, %s96
      %p103 = scmp.eq.s32.totalorder %s23, 1
      %p104 = por %p102, %p103
      %p105 = scmp.ne.s32.totalorder %s96, %s97
      %p106 = scmp.eq.s32.totalorder %s23, 0
      %p107 = por %p105, %p106
      %p108 = scmp.ne.s32.totalorder %s96, %s97
      %p109 = scmp.eq.s32.totalorder %s24, 1
      %p110 = por %p108, %p109
      %p112 = scmp.ne.s32.totalorder %s97, %s111
      %p113 = scmp.eq.s32.totalorder %s24, 0
      %p114 = por %p112, %p113
      %s116 = sadd.s32 %s115, 1
      %p119 = scmp.eq.s32.totalorder %s18, 1
      %p120 = scmp.ne.s32.totalorder %s115, %s117
      %p121 = scmp.eq.s32.totalorder %s18, 0
      %p122 = por %p120, %p121
      %p123 = scmp.ne.s32.totalorder %s115, %s117
      %p124 = scmp.eq.s32.totalorder %s23, 1
      %p125 = por %p123, %p124
      %p126 = scmp.ne.s32.totalorder %s117, %s118
      %p127 = scmp.eq.s32.totalorder %s23, 0
      %p128 = por %p126, %p127
      %p129 = scmp.ne.s32.totalorder %s117, %s118
      %p130 = scmp.eq.s32.totalorder %s24, 1
      %p131 = por %p129, %p130
      %p133 = scmp.ne.s32.totalorder %s118, %s132
      %p134 = scmp.eq.s32.totalorder %s24, 0
      %p135 = por %p133, %p134
      %s137 = sadd.s32 %s136, 1
      %p140 = scmp.eq.s32.totalorder %s18, 1
      %p141 = scmp.ne.s32.totalorder %s136, %s138
      %p142 = scmp.eq.s32.totalorder %s18, 0
      %p143 = por %p141, %p142
      %p144 = scmp.ne.s32.totalorder %s136, %s138
      %p145 = scmp.eq.s32.totalorder %s23, 1
      %p146 = por %p144, %p145
      %p147 = scmp.ne.s32.totalorder %s138, %s139
      %p148 = scmp.eq.s32.totalorder %s23, 0
      %p149 = por %p147, %p148
      %p150 = scmp.ne.s32.totalorder %s138, %s139
      %p151 = scmp.eq.s32.totalorder %s24, 1
      %p152 = por %p150, %p151
      %p154 = scmp.ne.s32.totalorder %s139, %s153
      %p155 = scmp.eq.s32.totalorder %s24, 0
      %p156 = por %p154, %p155
      %s158 = sadd.s32 %s157, 1
      %p161 = scmp.eq.s32.totalorder %s18, 1
      %p162 = scmp.ne.s32.totalorder %s157, %s159
      %p163 = scmp.eq.s32.totalorder %s18, 0
      %p164 = por %p162, %p163
      %p165 = scmp.ne.s32.totalorder %s157, %s159
      %p166 = scmp.eq.s32.totalorder %s23, 1
      %p167 = por %p165, %p166
      %p168 = scmp.ne.s32.totalorder %s159, %s160
      %p169 = scmp.eq.s32.totalorder %s23, 0
      %p170 = por %p168, %p169
      %p171 = scmp.ne.s32.totalorder %s159, %s160
      %p172 = scmp.eq.s32.totalorder %s24, 1
      %p173 = por %p171, %p172
      %p175 = scmp.ne.s32.totalorder %s160, %s174
      %p176 = scmp.eq.s32.totalorder %s24, 0
      %p177 = por %p175, %p176
      %s178 = ssub.s32 %s18, %s25
      %p179 = scmp.eq.s32.totalorder %s178, 0
      %s181 = sadd.s32 %s180, 1
      %s182 = scalar_select %p179, %s180, %s181
      %p185 = pneg %p179
      %p186 = scmp.eq.s32.totalorder %s18, 1
      %p187 = por %p185, %p186
      %p188 = scmp.ne.s32.totalorder %s180, %s183
      %p189 = scmp.eq.s32.totalorder %s18, 0
      %p190 = por %p188, %p189
      %p191 = scmp.ne.s32.totalorder %s180, %s183
      %p192 = scmp.eq.s32.totalorder %s23, 1
      %p193 = por %p191, %p192
      %p194 = scmp.ne.s32.totalorder %s183, %s184
      %p195 = scmp.eq.s32.totalorder %s23, 0
      %p196 = por %p194, %p195
      %p197 = scmp.ne.s32.totalorder %s183, %s184
      %p198 = scmp.eq.s32.totalorder %s24, 1
      %p199 = por %p197, %p198
      %p201 = scmp.ne.s32.totalorder %s184, %s200
      %p202 = scmp.eq.s32.totalorder %s24, 0
      %p203 = por %p201, %p202
      %p204 = scmp.le.s32.totalorder 1, %s18
      %p205 = scmp.lt.s32.totalorder %s18, 3
      %p206 = pnand %p204, %p205
      %p207 = pneg %p206
      // Predicated region
      $region9: #{generator_toy_forward.1} parent=5 // pred_check
        _
      $region10: #{generator_toy_forward.1} parent=5 // pred_check_branch
        %209 = sbr.rel (%p206) target = $region12
      $region11: #{generator_toy_forward.1} parent=5 // pred_region
        %s210 = ssub.s32 %s18, 1
        // Predicated region
        $region13: #{generator_toy_forward.1} parent=11 // pred_check
          %p211 = pneg %p65
        $region14: #{generator_toy_forward.1} parent=11 // pred_check_branch
          %213 = sbr.rel (%p211) target = $region16
        $region15: #{generator_toy_forward.1} parent=11 // pred_region
          %215 = vsyncadd [#allocation5], 0
          %s216 = sshll.u32 %s1, 4
          %s217 = int_to_ptr.hbm [resolvable:$true] %s216
          %s218 = sshll.u32 [#allocation4], 4
          %s219 = int_to_ptr.vmem [resolvable:$true] %s218
          %224 = dma.hbm_to_vmem [thread:$0]  %s217, 1024, %s219, [#allocation5], 64, 64, 4
        $region16: #{generator_toy_forward.1} parent=11 // pred_fallthru
          _
        // Predicated region
        $region17: #{generator_toy_forward.1} parent=11 // pred_check
          %p225 = pneg %p86
        $region18: #{generator_toy_forward.1} parent=11 // pred_check_branch
          %227 = sbr.rel (%p225) target = $region20
        $region19: #{generator_toy_forward.1} parent=11 // pred_region
          _
        $region20: #{generator_toy_forward.1} parent=11 // pred_fallthru
          _
        // Predicated region
        $region21: #{generator_toy_forward.1} parent=11 // pred_check
          %p228 = pneg %p107
        $region22: #{generator_toy_forward.1} parent=11 // pred_check_branch
          %230 = sbr.rel (%p228) target = $region24
        $region23: #{generator_toy_forward.1} parent=11 // pred_region
          %232 = vsyncadd [#allocation5], 0
          %s233 = sshll.u32 %s3, 4
          %s234 = int_to_ptr.hbm [resolvable:$true] %s233
          %s235 = sshll.u32 [#allocation6], 4
          %s236 = int_to_ptr.vmem [resolvable:$true] %s235
          %241 = dma.hbm_to_vmem [thread:$0]  %s234, 1024, %s236, [#allocation5], 64, 64, 4
        $region24: #{generator_toy_forward.1} parent=11 // pred_fallthru
          _
        // Predicated region
        $region25: #{generator_toy_forward.1} parent=11 // pred_check
          %p242 = pneg %p128
        $region26: #{generator_toy_forward.1} parent=11 // pred_check_branch
          %244 = sbr.rel (%p242) target = $region28
        $region27: #{generator_toy_forward.1} parent=11 // pred_region
          _
        $region28: #{generator_toy_forward.1} parent=11 // pred_fallthru
          _
        // Predicated region
        $region29: #{generator_toy_forward.1} parent=11 // pred_check
          %p245 = pneg %p149
        $region30: #{generator_toy_forward.1} parent=11 // pred_check_branch
          %247 = sbr.rel (%p245) target = $region32
        $region31: #{generator_toy_forward.1} parent=11 // pred_region
          %249 = vsyncadd [#allocation8], 0
          %s250 = sshll.u32 %s5, 4
          %s251 = int_to_ptr.hbm [resolvable:$true] %s250
          %s252 = sshll.u32 [#allocation7], 4
          %s253 = int_to_ptr.vmem [resolvable:$true] %s252
          %258 = dma.hbm_to_vmem [thread:$0]  %s251, 1024, %s253, [#allocation8], 64, 64, 4
        $region32: #{generator_toy_forward.1} parent=11 // pred_fallthru
          _
        // Predicated region
        $region33: #{generator_toy_forward.1} parent=11 // pred_check
          %p259 = pneg %p170
        $region34: #{generator_toy_forward.1} parent=11 // pred_check_branch
          %261 = sbr.rel (%p259) target = $region36
        $region35: #{generator_toy_forward.1} parent=11 // pred_region
          _
        $region36: #{generator_toy_forward.1} parent=11 // pred_fallthru
          _
      $region12: #{generator_toy_forward.1} parent=5 // pred_fallthru
        _
      %p262 = scmp.lt.s32.totalorder %s18, 2
      // Predicated region
      $region37: #{generator_toy_forward.1} parent=5 // pred_check
        %p263 = pneg %p262
      $region38: #{generator_toy_forward.1} parent=5 // pred_check_branch
        %265 = sbr.rel (%p263) target = $region40
      $region39: #{generator_toy_forward.1} parent=5 // pred_region
        // Predicated region
        $region41: #{generator_toy_forward.1} parent=39 // pred_check
          %p266 = pneg %p38
        $region42: #{generator_toy_forward.1} parent=39 // pred_check_branch
          %268 = sbr.rel (%p266) target = $region44
        $region43: #{generator_toy_forward.1} parent=39 // pred_region
          %s269 = sand.u32 %s28, 1
          %s270 = scalar_lea.sflag [#allocation3], %s269
          %s271 = sand.u32 %s28, 1
          %s272 = smul.addr %s271, 104
          %s273 = scalar_lea.vmem [#allocation2], %s272
          %s274 = smul.u32 13, %s18
          %s275 = ssub.s32 25, %s274
          %p276 = scmp.lt.s32.totalorder %s275, 13
          %s277 = scalar_select %p276, %s275, 13
          %s278 = smul.u32 8, %s277
          %s279 = ssub.s32 104, %s278
          %s280 = sshll.u32 %s279, 4
          %281 = vsyncadd %s270, %s280
          %p282 = scmp.ne.s32.totalorder 0, %s278
          %s283 = smul.addr %s274, 8
          %s284 = scalar_lea.hbm %s0, %s283
          %s285 = smul.u32 8, %s277
          %s286 = sshll.u32 %s284, 4
          %s287 = int_to_ptr.hbm [resolvable:$true] %s286
          %s288 = sshll.u32 %s273, 4
          %s289 = int_to_ptr.vmem [resolvable:$true] %s288
          %s290 = sshll.u32 %s285, 4
          %294 = dma.hbm_to_vmem [thread:$0]  (%p282), %s287, %s290, %s289, %s270, 128, 128, 8
        $region44: #{generator_toy_forward.1} parent=39 // pred_fallthru
          _
      $region40: #{generator_toy_forward.1} parent=5 // pred_fallthru
        _
      %p295 = scmp.le.s32.totalorder 1, %s18
      %p296 = scmp.lt.s32.totalorder %s18, 3
      %p297 = pnand %p295, %p296
      %p298 = pneg %p297
      // Predicated region
      $region45: #{generator_toy_forward.1} parent=5 // pred_check
        _
      $region46: #{generator_toy_forward.1} parent=5 // pred_check_branch
        %300 = sbr.rel (%p297) target = $region48
      $region47: #{generator_toy_forward.1} parent=5 // pred_region
        %s301 = ssub.s32 %s18, 1
        %s302 = sand.u32 %s31, 1
        %s303 = scalar_lea.sflag [#allocation3], %s302
        %s304 = sand.u32 %s31, 1
        %s305 = smul.addr %s304, 104
        %s306 = scalar_lea.vmem [#allocation2], %s305
        // Predicated region
        $region49: #{generator_toy_forward.1} parent=47 // pred_check
          %p307 = pneg %p44
        $region50: #{generator_toy_forward.1} parent=47 // pred_check_branch
          %309 = sbr.rel (%p307) target = $region52
        $region51: #{generator_toy_forward.1} parent=47 // pred_region
          %311 = dma.done %s303, 1664
        $region52: #{generator_toy_forward.1} parent=47 // pred_fallthru
          _
        // Predicated region
        $region53: #{generator_toy_forward.1} parent=47 // pred_check
          %p312 = pneg %p65
        $region54: #{generator_toy_forward.1} parent=47 // pred_check_branch
          %314 = sbr.rel (%p312) target = $region56
        $region55: #{generator_toy_forward.1} parent=47 // pred_region
          %316 = dma.done [#allocation5], 1024
        $region56: #{generator_toy_forward.1} parent=47 // pred_fallthru
          _
        // Predicated region
        $region57: #{generator_toy_forward.1} parent=47 // pred_check
          %p317 = pneg %p107
        $region58: #{generator_toy_forward.1} parent=47 // pred_check_branch
          %319 = sbr.rel (%p317) target = $region60
        $region59: #{generator_toy_forward.1} parent=47 // pred_region
          %321 = dma.done [#allocation5], 1024
        $region60: #{generator_toy_forward.1} parent=47 // pred_fallthru
          _
        // Predicated region
        $region61: #{generator_toy_forward.1} parent=47 // pred_check
          %p322 = pneg %p149
        $region62: #{generator_toy_forward.1} parent=47 // pred_check_branch
          %324 = sbr.rel (%p322) target = $region64
        $region63: #{generator_toy_forward.1} parent=47 // pred_region
          %326 = dma.done [#allocation8], 1024
        $region64: #{generator_toy_forward.1} parent=47 // pred_fallthru
          _
        %s327 = sand.u32 %s31, 1
        %s328 = scalar_lea.sflag [#allocation3], %s327
        %s329 = sand.u32 %s31, 1
        %s330 = smul.addr %s329, 104
        %s331 = scalar_lea.vmem [#allocation2], %s330
        %p332 = pneg %p44
        %p333 = pneg %p41
        %p334 = pneg %p65
        %p335 = pneg %p62
        %p336 = pneg %p86
        %p337 = pneg %p83
        %p338 = pneg %p107
        %p339 = pneg %p104
        %p340 = pneg %p128
        %p341 = pneg %p125
        %p342 = pneg %p149
        %p343 = pneg %p146
        %p344 = pneg %p170
        %p345 = pneg %p167
        %p346 = pneg %p196
        %p347 = pneg %p193
        %s348 = sand.u32 %s183, 1
        %s349 = sand.u32 %s183, 1
        %s350 = smul.addr %s349, 104
        %s351 = scalar_lea.vmem [#allocation9], %s350
        %s352 = smul.u32 13, %s23
        %s353 = ssub.s32 25, %s352
        %p354 = scmp.lt.s32.totalorder %s353, 13
        %s355 = scalar_select %p354, %s353, 13
        %s356 = smul.u32 8, %s355
        %s357 = smul.u32 13, %s23
        %s358 = ssub.s32 25, %s357
        %p359 = scmp.lt.s32.totalorder %s358, 13
        %s360 = scalar_select %p359, %s358, 13
        %s361 = smul.u32 8, %s360
        %v362 = vld [vmem:[%s306] sm:$0xff]
        %v363 = vld [vmem:[%s306 + $0x8] sm:$0xff]
        %v364 = vld [vmem:[%s306 + $0x10] sm:$0xff]
        %v365 = vld [vmem:[%s306 + $0x18] sm:$0xff]
        %v366 = vld [vmem:[%s306 + $0x20] sm:$0xff]
        %v367 = vld [vmem:[%s306 + $0x28] sm:$0xff]
        %v368 = vld [vmem:[%s306 + $0x30] sm:$0xff]
        %v369 = vld [vmem:[%s306 + $0x38] sm:$0xff]
        %v370 = vld [vmem:[%s306 + $0x40] sm:$0xff]
        %v371 = vld [vmem:[%s306 + $0x48] sm:$0xff]
        %v372 = vld [vmem:[%s306 + $0x50] sm:$0xff]
        %v373 = vld [vmem:[%s306 + $0x58] sm:$0xff]
        %v374 = vld [vmem:[%s306 + $0x60] sm:$0xff]
        %v375 = vpack.c.bf16 %v363, %v362
        %v376 = vpack.c.bf16 %v365, %v364
        %v377 = vpack.c.bf16 %v367, %v366
        %v378 = vpack.c.bf16 %v369, %v368
        %v379 = vpack.c.bf16 %v371, %v370
        %v380 = vpack.c.bf16 %v373, %v372
        %v381 = vpack.c.bf16 %v374, %v374
        %v382 = vld [vmem:[#allocation4] sm:$0xf]
        %v383 = vld [vmem:[#allocation4 + $0x4] sm:$0xf]
        %v384 = vld [vmem:[#allocation4 + $0x8] sm:$0xf]
        %v385 = vld [vmem:[#allocation4 + $0xc] sm:$0xf]
        %v386 = vld [vmem:[#allocation4 + $0x10] sm:$0xf]
        %v387 = vld [vmem:[#allocation4 + $0x14] sm:$0xf]
        %v388 = vld [vmem:[#allocation4 + $0x18] sm:$0xf]
        %v389 = vld [vmem:[#allocation4 + $0x1c] sm:$0xf]
        %v390 = vld [vmem:[#allocation4 + $0x20] sm:$0xf]
        %v391 = vld [vmem:[#allocation4 + $0x24] sm:$0xf]
        %v392 = vld [vmem:[#allocation4 + $0x28] sm:$0xf]
        %v393 = vld [vmem:[#allocation4 + $0x2c] sm:$0xf]
        %v394 = vld [vmem:[#allocation4 + $0x30] sm:$0xf]
        %v395 = vld [vmem:[#allocation4 + $0x34] sm:$0xf]
        %v396 = vld [vmem:[#allocation4 + $0x38] sm:$0xf]
        %v397 = vld [vmem:[#allocation4 + $0x3c] sm:$0xf]
        %v398 = vld [vmem:[%s2] sm:$0x1]
        %v400 = vperm.slane %v398, 0
        %v418 = vunpack.c.l.b16 %v382
        %v419 = vunpack.c.l.b16 %v383
        %v420 = vunpack.c.l.b16 %v384
        %v421 = vunpack.c.l.b16 %v385
        %v422 = vunpack.c.l.b16 %v386
        %v423 = vunpack.c.l.b16 %v387
        %v424 = vunpack.c.l.b16 %v388
        %v425 = vunpack.c.l.b16 %v389
        %v426 = vunpack.c.l.b16 %v390
        %v427 = vunpack.c.l.b16 %v391
        %v428 = vunpack.c.l.b16 %v392
        %v429 = vunpack.c.l.b16 %v393
        %v430 = vunpack.c.l.b16 %v394
        %v431 = vunpack.c.l.b16 %v395
        %v432 = vunpack.c.l.b16 %v396
        %v433 = vunpack.c.l.b16 %v397
        %v434 = vpack.c.b16 %v419, %v418
        %v435 = vpack.c.b16 %v421, %v420
        %v436 = vpack.c.b16 %v423, %v422
        %v437 = vpack.c.b16 %v425, %v424
        %v438 = vpack.c.b16 %v427, %v426
        %v439 = vpack.c.b16 %v429, %v428
        %v440 = vpack.c.b16 %v431, %v430
        %v441 = vpack.c.b16 %v433, %v432
        %450 = vmatpush.bf16.msra.mxu0 %v441
        %451 = vmatpush.bf16.msra.mxu0 %v440
        %452 = vmatpush.bf16.msra.mxu0 %v439
        %453 = vmatpush.bf16.msra.mxu0 %v438
        %454 = vmatpush.bf16.msra.mxu0 %v437
        %455 = vmatpush.bf16.msra.mxu0 %v436
        %456 = vmatpush.bf16.msra.mxu0 %v435
        %457 = vmatpush.bf16.msra.mxu0 %v434
        %458 = vmatmul.bf16.gmra.mxu0 %v375
        %v459 = vpop.f32.mrf.mxu0
        %v460 = vadd.f32 %v400, %v459
        %v461 = vpop.f32.mrf.mxu0
        %v462 = vadd.f32 %v400, %v461
        %463 = vmatmul.bf16.gmra.mxu0 %v376
        %v464 = vpop.f32.mrf.mxu0
        %v465 = vadd.f32 %v400, %v464
        %v466 = vpop.f32.mrf.mxu0
        %v467 = vadd.f32 %v400, %v466
        %468 = vmatmul.bf16.gmra.mxu0 %v377
        %v469 = vpop.f32.mrf.mxu0
        %v470 = vadd.f32 %v400, %v469
        %v471 = vpop.f32.mrf.mxu0
        %v472 = vadd.f32 %v400, %v471
        %473 = vmatmul.bf16.gmra.mxu0 %v378
        %v474 = vpop.f32.mrf.mxu0
        %v475 = vadd.f32 %v400, %v474
        %v476 = vpop.f32.mrf.mxu0
        %v477 = vadd.f32 %v400, %v476
        %478 = vmatmul.bf16.gmra.mxu0 %v379
        %v479 = vpop.f32.mrf.mxu0
        %v480 = vadd.f32 %v400, %v479
        %v481 = vpop.f32.mrf.mxu0
        %v482 = vadd.f32 %v400, %v481
        %483 = vmatmul.bf16.gmra.mxu0 %v380
        %v484 = vpop.f32.mrf.mxu0
        %v485 = vadd.f32 %v400, %v484
        %v486 = vpop.f32.mrf.mxu0
        %v487 = vadd.f32 %v400, %v486
        %488 = vmatmul.bf16.gmra.mxu0 %v381
        %v489 = vpop.f32.mrf.mxu0
        %v490 = vadd.f32 %v400, %v489
        %v491 = vpop.f32.mrf.mxu0
        %492 = vdwg.mxu0
        %v493 = vtanh.pop %v460
        %v494 = vtanh.pop %v462
        %v495 = vtanh.pop %v465
        %v496 = vtanh.pop %v467
        %v497 = vtanh.pop %v470
        %v498 = vtanh.pop %v472
        %v499 = vtanh.pop %v475
        %v500 = vtanh.pop %v477
        %v501 = vtanh.pop %v480
        %v502 = vtanh.pop %v482
        %v503 = vtanh.pop %v485
        %v504 = vtanh.pop %v487
        %v505 = vtanh.pop %v490
        %v506 = vpack.c.bf16 %v494, %v493
        %v507 = vpack.c.bf16 %v496, %v495
        %v508 = vpack.c.bf16 %v498, %v497
        %v509 = vpack.c.bf16 %v500, %v499
        %v510 = vpack.c.bf16 %v502, %v501
        %v511 = vpack.c.bf16 %v504, %v503
        %v512 = vpack.c.bf16 %v505, %v505
        %v513 = vld [vmem:[#allocation6] sm:$0xf]
        %v514 = vld [vmem:[#allocation6 + $0x4] sm:$0xf]
        %v515 = vld [vmem:[#allocation6 + $0x8] sm:$0xf]
        %v516 = vld [vmem:[#allocation6 + $0xc] sm:$0xf]
        %v517 = vld [vmem:[#allocation6 + $0x10] sm:$0xf]
        %v518 = vld [vmem:[#allocation6 + $0x14] sm:$0xf]
        %v519 = vld [vmem:[#allocation6 + $0x18] sm:$0xf]
        %v520 = vld [vmem:[#allocation6 + $0x1c] sm:$0xf]
        %v521 = vld [vmem:[#allocation6 + $0x20] sm:$0xf]
        %v522 = vld [vmem:[#allocation6 + $0x24] sm:$0xf]
        %v523 = vld [vmem:[#allocation6 + $0x28] sm:$0xf]
        %v524 = vld [vmem:[#allocation6 + $0x2c] sm:$0xf]
        %v525 = vld [vmem:[#allocation6 + $0x30] sm:$0xf]
        %v526 = vld [vmem:[#allocation6 + $0x34] sm:$0xf]
        %v527 = vld [vmem:[#allocation6 + $0x38] sm:$0xf]
        %v528 = vld [vmem:[#allocation6 + $0x3c] sm:$0xf]
        %v529 = vld [vmem:[%s4] sm:$0x1]
        %v531 = vperm.slane %v529, 0
        %v549 = vunpack.c.l.b16 %v513
        %v550 = vunpack.c.l.b16 %v514
        %v551 = vunpack.c.l.b16 %v515
        %v552 = vunpack.c.l.b16 %v516
        %v553 = vunpack.c.l.b16 %v517
        %v554 = vunpack.c.l.b16 %v518
        %v555 = vunpack.c.l.b16 %v519
        %v556 = vunpack.c.l.b16 %v520
        %v557 = vunpack.c.l.b16 %v521
        %v558 = vunpack.c.l.b16 %v522
        %v559 = vunpack.c.l.b16 %v523
        %v560 = vunpack.c.l.b16 %v524
        %v561 = vunpack.c.l.b16 %v525
        %v562 = vunpack.c.l.b16 %v526
        %v563 = vunpack.c.l.b16 %v527
        %v564 = vunpack.c.l.b16 %v528
        %v565 = vpack.c.b16 %v550, %v549
        %v566 = vpack.c.b16 %v552, %v551
        %v567 = vpack.c.b16 %v554, %v553
        %v568 = vpack.c.b16 %v556, %v555
        %v569 = vpack.c.b16 %v558, %v557
        %v570 = vpack.c.b16 %v560, %v559
        %v571 = vpack.c.b16 %v562, %v561
        %v572 = vpack.c.b16 %v564, %v563
        %581 = vmatpush.bf16.msra.mxu0 %v572
        %582 = vmatpush.bf16.msra.mxu0 %v571
        %583 = vmatpush.bf16.msra.mxu0 %v570
        %584 = vmatpush.bf16.msra.mxu0 %v569
        %585 = vmatpush.bf16.msra.mxu0 %v568
        %586 = vmatpush.bf16.msra.mxu0 %v567
        %587 = vmatpush.bf16.msra.mxu0 %v566
        %588 = vmatpush.bf16.msra.mxu0 %v565
        %589 = vmatmul.bf16.gmra.mxu0 %v506
        %v590 = vpop.f32.mrf.mxu0
        %v591 = vadd.f32 %v531, %v590
        %v592 = vpop.f32.mrf.mxu0
        %v593 = vadd.f32 %v531, %v592
        %594 = vmatmul.bf16.gmra.mxu0 %v507
        %v595 = vpop.f32.mrf.mxu0
        %v596 = vadd.f32 %v531, %v595
        %v597 = vpop.f32.mrf.mxu0
        %v598 = vadd.f32 %v531, %v597
        %599 = vmatmul.bf16.gmra.mxu0 %v508
        %v600 = vpop.f32.mrf.mxu0
        %v601 = vadd.f32 %v531, %v600
        %v602 = vpop.f32.mrf.mxu0
        %v603 = vadd.f32 %v531, %v602
        %604 = vmatmul.bf16.gmra.mxu0 %v509
        %v605 = vpop.f32.mrf.mxu0
        %v606 = vadd.f32 %v531, %v605
        %v607 = vpop.f32.mrf.mxu0
        %v608 = vadd.f32 %v531, %v607
        %609 = vmatmul.bf16.gmra.mxu0 %v510
        %v610 = vpop.f32.mrf.mxu0
        %v611 = vadd.f32 %v531, %v610
        %v612 = vpop.f32.mrf.mxu0
        %v613 = vadd.f32 %v531, %v612
        %614 = vmatmul.bf16.gmra.mxu0 %v511
        %v615 = vpop.f32.mrf.mxu0
        %v616 = vadd.f32 %v531, %v615
        %v617 = vpop.f32.mrf.mxu0
        %v618 = vadd.f32 %v531, %v617
        %619 = vmatmul.bf16.gmra.mxu0 %v512
        %v620 = vpop.f32.mrf.mxu0
        %v621 = vadd.f32 %v531, %v620
        %v622 = vpop.f32.mrf.mxu0
        %623 = vdwg.mxu0
        %v624 = vtanh.pop %v591
        %v625 = vtanh.pop %v593
        %v626 = vtanh.pop %v596
        %v627 = vtanh.pop %v598
        %v628 = vtanh.pop %v601
        %v629 = vtanh.pop %v603
        %v630 = vtanh.pop %v606
        %v631 = vtanh.pop %v608
        %v632 = vtanh.pop %v611
        %v633 = vtanh.pop %v613
        %v634 = vtanh.pop %v616
        %v635 = vtanh.pop %v618
        %v636 = vtanh.pop %v621
        %v637 = vpack.c.bf16 %v625, %v624
        %v638 = vpack.c.bf16 %v627, %v626
        %v639 = vpack.c.bf16 %v629, %v628
        %v640 = vpack.c.bf16 %v631, %v630
        %v641 = vpack.c.bf16 %v633, %v632
        %v642 = vpack.c.bf16 %v635, %v634
        %v643 = vpack.c.bf16 %v636, %v636
        %v644 = vld [vmem:[#allocation7] sm:$0xf]
        %v645 = vld [vmem:[#allocation7 + $0x4] sm:$0xf]
        %v646 = vld [vmem:[#allocation7 + $0x8] sm:$0xf]
        %v647 = vld [vmem:[#allocation7 + $0xc] sm:$0xf]
        %v648 = vld [vmem:[#allocation7 + $0x10] sm:$0xf]
        %v649 = vld [vmem:[#allocation7 + $0x14] sm:$0xf]
        %v650 = vld [vmem:[#allocation7 + $0x18] sm:$0xf]
        %v651 = vld [vmem:[#allocation7 + $0x1c] sm:$0xf]
        %v652 = vld [vmem:[#allocation7 + $0x20] sm:$0xf]
        %v653 = vld [vmem:[#allocation7 + $0x24] sm:$0xf]
        %v654 = vld [vmem:[#allocation7 + $0x28] sm:$0xf]
        %v655 = vld [vmem:[#allocation7 + $0x2c] sm:$0xf]
        %v656 = vld [vmem:[#allocation7 + $0x30] sm:$0xf]
        %v657 = vld [vmem:[#allocation7 + $0x34] sm:$0xf]
        %v658 = vld [vmem:[#allocation7 + $0x38] sm:$0xf]
        %v659 = vld [vmem:[#allocation7 + $0x3c] sm:$0xf]
        %v660 = vld [vmem:[%s6] sm:$0x1]
        %v662 = vperm.slane %v660, 0
        %v680 = vunpack.c.l.b16 %v644
        %v681 = vunpack.c.l.b16 %v645
        %v682 = vunpack.c.l.b16 %v646
        %v683 = vunpack.c.l.b16 %v647
        %v684 = vunpack.c.l.b16 %v648
        %v685 = vunpack.c.l.b16 %v649
        %v686 = vunpack.c.l.b16 %v650
        %v687 = vunpack.c.l.b16 %v651
        %v688 = vunpack.c.l.b16 %v652
        %v689 = vunpack.c.l.b16 %v653
        %v690 = vunpack.c.l.b16 %v654
        %v691 = vunpack.c.l.b16 %v655
        %v692 = vunpack.c.l.b16 %v656
        %v693 = vunpack.c.l.b16 %v657
        %v694 = vunpack.c.l.b16 %v658
        %v695 = vunpack.c.l.b16 %v659
        %v696 = vpack.c.b16 %v681, %v680
        %v697 = vpack.c.b16 %v683, %v682
        %v698 = vpack.c.b16 %v685, %v684
        %v699 = vpack.c.b16 %v687, %v686
        %v700 = vpack.c.b16 %v689, %v688
        %v701 = vpack.c.b16 %v691, %v690
        %v702 = vpack.c.b16 %v693, %v692
        %v703 = vpack.c.b16 %v695, %v694
        %712 = vmatpush.bf16.msra.mxu0 %v703
        %713 = vmatpush.bf16.msra.mxu0 %v702
        %714 = vmatpush.bf16.msra.mxu0 %v701
        %715 = vmatpush.bf16.msra.mxu0 %v700
        %716 = vmatpush.bf16.msra.mxu0 %v699
        %717 = vmatpush.bf16.msra.mxu0 %v698
        %718 = vmatpush.bf16.msra.mxu0 %v697
        %719 = vmatpush.bf16.msra.mxu0 %v696
        %720 = vmatmul.bf16.gmra.mxu0 %v637
        %v721 = vpop.f32.mrf.mxu0
        %v722 = vadd.f32 %v662, %v721
        %v723 = vpop.f32.mrf.mxu0
        %v724 = vadd.f32 %v662, %v723
        %725 = vmatmul.bf16.gmra.mxu0 %v638
        %v726 = vpop.f32.mrf.mxu0
        %v727 = vadd.f32 %v662, %v726
        %v728 = vpop.f32.mrf.mxu0
        %v729 = vadd.f32 %v662, %v728
        %730 = vmatmul.bf16.gmra.mxu0 %v639
        %v731 = vpop.f32.mrf.mxu0
        %v732 = vadd.f32 %v662, %v731
        %v733 = vpop.f32.mrf.mxu0
        %v734 = vadd.f32 %v662, %v733
        %735 = vmatmul.bf16.gmra.mxu0 %v640
        %v736 = vpop.f32.mrf.mxu0
        %v737 = vadd.f32 %v662, %v736
        %v738 = vpop.f32.mrf.mxu0
        %v739 = vadd.f32 %v662, %v738
        %740 = vmatmul.bf16.gmra.mxu0 %v641
        %v741 = vpop.f32.mrf.mxu0
        %v742 = vadd.f32 %v662, %v741
        %v743 = vpop.f32.mrf.mxu0
        %v744 = vadd.f32 %v662, %v743
        %745 = vmatmul.bf16.gmra.mxu0 %v642
        %v746 = vpop.f32.mrf.mxu0
        %v747 = vadd.f32 %v662, %v746
        %v748 = vpop.f32.mrf.mxu0
        %v749 = vadd.f32 %v662, %v748
        %750 = vmatmul.bf16.gmra.mxu0 %v643
        %v751 = vpop.f32.mrf.mxu0
        %v752 = vadd.f32 %v662, %v751
        %v753 = vpop.f32.mrf.mxu0
        %754 = vdwg.mxu0
        %vm755 = vcmask 15360
        %756 = vst.msk [vmem:[%s351] sm:$0xff] %vm755, %v722
        %757 = vst.msk [vmem:[%s351 + $0x8] sm:$0xff] %vm755, %v724
        %758 = vst.msk [vmem:[%s351 + $0x10] sm:$0xff] %vm755, %v727
        %759 = vst.msk [vmem:[%s351 + $0x18] sm:$0xff] %vm755, %v729
        %760 = vst.msk [vmem:[%s351 + $0x20] sm:$0xff] %vm755, %v732
        %761 = vst.msk [vmem:[%s351 + $0x28] sm:$0xff] %vm755, %v734
        %762 = vst.msk [vmem:[%s351 + $0x30] sm:$0xff] %vm755, %v737
        %763 = vst.msk [vmem:[%s351 + $0x38] sm:$0xff] %vm755, %v739
        %764 = vst.msk [vmem:[%s351 + $0x40] sm:$0xff] %vm755, %v742
        %765 = vst.msk [vmem:[%s351 + $0x48] sm:$0xff] %vm755, %v744
        %766 = vst.msk [vmem:[%s351 + $0x50] sm:$0xff] %vm755, %v747
        %767 = vst.msk [vmem:[%s351 + $0x58] sm:$0xff] %vm755, %v749
        %768 = vst.msk [vmem:[%s351 + $0x60] sm:$0xff] %vm755, %v752
        %s769 = sand.u32 %s183, 1
        %s770 = sand.u32 %s183, 1
        %s771 = smul.addr %s770, 104
        %s772 = scalar_lea.vmem [#allocation9], %s771
        // Predicated region
        $region65: #{generator_toy_forward.1} parent=47 // pred_check
          %p773 = pneg %p193
        $region66: #{generator_toy_forward.1} parent=47 // pred_check_branch
          %775 = sbr.rel (%p773) target = $region68
        $region67: #{generator_toy_forward.1} parent=47 // pred_region
          %s776 = smul.u32 13, %s23
          %s777 = ssub.s32 25, %s776
          %p778 = scmp.lt.s32.totalorder %s777, 13
          %s779 = scalar_select %p778, %s777, 13
          %s780 = smul.u32 8, %s779
          %p781 = scmp.ne.s32.totalorder 0, %s780
          %s782 = smul.addr %s776, 8
          %s783 = scalar_lea.vmem %s7, %s782
          // Predicated region
          $region69: #{generator_toy_forward.1} parent=67 // pred_check
            %p784 = pneg %p781
          $region70: #{generator_toy_forward.1} parent=67 // pred_check_branch
            %786 = sbr.rel (%p784) target = $region72
          $region71: #{generator_toy_forward.1} parent=67 // pred_region
            // Predicated region
            $region73: #{generator_toy_forward.1} parent=71 // pred_check
              _
            $region74: #{generator_toy_forward.1} parent=71 // pred_check_branch
              %788 = sbr.rel (0) target = $region76
            $region75: #{generator_toy_forward.1} parent=71 // pred_region
              // Predicated region
              $region95: #{generator_toy_forward.1} parent=75 // pred_check
                _
              $region96: #{generator_toy_forward.1} parent=75 // pred_check_branch
                %863 = sbr.rel (0) target = $region98
              $region97: #{generator_toy_forward.1} parent=75 // pred_region
                %s864 = sdiv.u32.pop %s779, 13
                %s865 = srem.u32.pop %s779, 13
                // While loop
                $region99: #{generator_toy_forward.1} parent=97 // loop_pre_header
                  _
                $region100: #{generator_toy_forward.1} parent=97 // loop_header
                  %s867 = sphi 0, %s869
                  %p868 = scmp.ge.s32.totalorder %s867, %s864
                  %s872 = sphi 0, %s903
                  %s873 = sphi %s772, %s906
                  %s874 = sphi %s783, %s907
                $region101: #{generator_toy_forward.1} parent=97 // loop_header_branch
                  %871 = sbr.rel (%p868) target = $region105
                $region102: #{generator_toy_forward.1} parent=97 // loop_body
                  %v875 = vld [vmem:[%s873] sm:$0xff]
                  %876 = vst [vmem:[%s874] sm:$0xff] %v875
                  %v877 = vld [vmem:[%s873 + $0x8] sm:$0xff]
                  %878 = vst [vmem:[%s874 + $0x8] sm:$0xff] %v877
                  %v879 = vld [vmem:[%s873 + $0x10] sm:$0xff]
                  %880 = vst [vmem:[%s874 + $0x10] sm:$0xff] %v879
                  %v881 = vld [vmem:[%s873 + $0x18] sm:$0xff]
                  %882 = vst [vmem:[%s874 + $0x18] sm:$0xff] %v881
                  %v883 = vld [vmem:[%s873 + $0x20] sm:$0xff]
                  %884 = vst [vmem:[%s874 + $0x20] sm:$0xff] %v883
                  %v885 = vld [vmem:[%s873 + $0x28] sm:$0xff]
                  %886 = vst [vmem:[%s874 + $0x28] sm:$0xff] %v885
                  %v887 = vld [vmem:[%s873 + $0x30] sm:$0xff]
                  %888 = vst [vmem:[%s874 + $0x30] sm:$0xff] %v887
                  %v889 = vld [vmem:[%s873 + $0x38] sm:$0xff]
                  %890 = vst [vmem:[%s874 + $0x38] sm:$0xff] %v889
                  %v891 = vld [vmem:[%s873 + $0x40] sm:$0xff]
                  %892 = vst [vmem:[%s874 + $0x40] sm:$0xff] %v891
                  %v893 = vld [vmem:[%s873 + $0x48] sm:$0xff]
                  %894 = vst [vmem:[%s874 + $0x48] sm:$0xff] %v893
                  %v895 = vld [vmem:[%s873 + $0x50] sm:$0xff]
                  %896 = vst [vmem:[%s874 + $0x50] sm:$0xff] %v895
                  %v897 = vld [vmem:[%s873 + $0x58] sm:$0xff]
                  %898 = vst [vmem:[%s874 + $0x58] sm:$0xff] %v897
                  %v899 = vld [vmem:[%s873 + $0x60] sm:$0xff]
                  %900 = vst [vmem:[%s874 + $0x60] sm:$0xff] %v899
                  %s901 = sadd.s32 1, %s872
                  %p902 = scmp.ge.s32.totalorder %s901, %s864
                  %s903 = scalar_select %p902, 0, %s901
                  %s904 = smul.u32 %s903, 104
                  %s905 = smul.u32 %s903, 104
                  %s906 = scalar_lea.vmem %s772, %s904 [#allocation9]
                  %s907 = scalar_lea.vmem %s783, %s905
                $region103: #{generator_toy_forward.1} parent=97 // loop_footer
                  %s869 = sadd.s32 %s867, 1
                $region104: #{generator_toy_forward.1} parent=97 // loop_footer_branch
                  %866 = sbr.rel target = $region100
                $region105: #{generator_toy_forward.1} parent=97 // loop_exit
                  _
                %s908 = sdiv.u32.pop %s779, 13
                %s909 = srem.u32.pop %s779, 13
                %s910 = smul.u32 %s908, 13
                %s911 = smul.u32 8, %s910
                %s912 = scalar_lea.vmem %s772, %s911 [#allocation9]
                %s913 = smul.u32 8, %s910
                %s914 = scalar_lea.vmem %s783, %s913
                // While loop
                $region106: #{generator_toy_forward.1} parent=97 // loop_pre_header
                  _
                $region107: #{generator_toy_forward.1} parent=97 // loop_header
                  %s916 = sphi 0, %s918
                  %p917 = scmp.ge.s32.totalorder %s916, %s909
                  %s921 = sphi 0, %s928
                  %s922 = sphi %s912, %s931
                  %s923 = sphi %s914, %s932
                $region108: #{generator_toy_forward.1} parent=97 // loop_header_branch
                  %920 = sbr.rel (%p917) target = $region112
                $region109: #{generator_toy_forward.1} parent=97 // loop_body
                  %v924 = vld [vmem:[%s922] sm:$0xff]
                  %925 = vst [vmem:[%s923] sm:$0xff] %v924
                  %s926 = sadd.s32 1, %s921
                  %p927 = scmp.ge.s32.totalorder %s926, %s909
                  %s928 = scalar_select %p927, 0, %s926
                  %s929 = smul.u32 %s928, 8
                  %s930 = smul.u32 %s928, 8
                  %s931 = scalar_lea.vmem %s912, %s929 [#allocation9]
                  %s932 = scalar_lea.vmem %s914, %s930
                $region110: #{generator_toy_forward.1} parent=97 // loop_footer
                  %s918 = sadd.s32 %s916, 1
                $region111: #{generator_toy_forward.1} parent=97 // loop_footer_branch
                  %915 = sbr.rel target = $region107
                $region112: #{generator_toy_forward.1} parent=97 // loop_exit
                  _
              $region98: #{generator_toy_forward.1} parent=75 // pred_fallthru
                _
              // Predicated region
              $region113: #{generator_toy_forward.1} parent=75 // pred_check
                _
              $region114: #{generator_toy_forward.1} parent=75 // pred_check_branch
                %934 = sbr.rel target = $region116
              $region115: #{generator_toy_forward.1} parent=75 // pred_region
                _
              $region116: #{generator_toy_forward.1} parent=75 // pred_fallthru
                _
            $region76: #{generator_toy_forward.1} parent=71 // pred_fallthru
              _
            // Predicated region
            $region77: #{generator_toy_forward.1} parent=71 // pred_check
              _
            $region78: #{generator_toy_forward.1} parent=71 // pred_check_branch
              %790 = sbr.rel target = $region80
            $region79: #{generator_toy_forward.1} parent=71 // pred_region
              %s792 = ssub.s32 256, 1
              %s793 = sdiv.u32.pop %s779, 13
              %s794 = srem.u32.pop %s779, 13
              // While loop
              $region81: #{generator_toy_forward.1} parent=79 // loop_pre_header
                _
              $region82: #{generator_toy_forward.1} parent=79 // loop_header
                %s796 = sphi 0, %s798
                %p797 = scmp.ge.s32.totalorder %s796, %s793
                %s801 = sphi 0, %s832
                %s802 = sphi %s772, %s835
                %s803 = sphi %s783, %s836
              $region83: #{generator_toy_forward.1} parent=79 // loop_header_branch
                %800 = sbr.rel (%p797) target = $region87
              $region84: #{generator_toy_forward.1} parent=79 // loop_body
                %v804 = vld [vmem:[%s802] sm:%s792]
                %805 = vst [vmem:[%s803] sm:%s792] %v804
                %v806 = vld [vmem:[%s802 + $0x8] sm:%s792]
                %807 = vst [vmem:[%s803 + $0x8] sm:%s792] %v806
                %v808 = vld [vmem:[%s802 + $0x10] sm:%s792]
                %809 = vst [vmem:[%s803 + $0x10] sm:%s792] %v808
                %v810 = vld [vmem:[%s802 + $0x18] sm:%s792]
                %811 = vst [vmem:[%s803 + $0x18] sm:%s792] %v810
                %v812 = vld [vmem:[%s802 + $0x20] sm:%s792]
                %813 = vst [vmem:[%s803 + $0x20] sm:%s792] %v812
                %v814 = vld [vmem:[%s802 + $0x28] sm:%s792]
                %815 = vst [vmem:[%s803 + $0x28] sm:%s792] %v814
                %v816 = vld [vmem:[%s802 + $0x30] sm:%s792]
                %817 = vst [vmem:[%s803 + $0x30] sm:%s792] %v816
                %v818 = vld [vmem:[%s802 + $0x38] sm:%s792]
                %819 = vst [vmem:[%s803 + $0x38] sm:%s792] %v818
                %v820 = vld [vmem:[%s802 + $0x40] sm:%s792]
                %821 = vst [vmem:[%s803 + $0x40] sm:%s792] %v820
                %v822 = vld [vmem:[%s802 + $0x48] sm:%s792]
                %823 = vst [vmem:[%s803 + $0x48] sm:%s792] %v822
                %v824 = vld [vmem:[%s802 + $0x50] sm:%s792]
                %825 = vst [vmem:[%s803 + $0x50] sm:%s792] %v824
                %v826 = vld [vmem:[%s802 + $0x58] sm:%s792]
                %827 = vst [vmem:[%s803 + $0x58] sm:%s792] %v826
                %v828 = vld [vmem:[%s802 + $0x60] sm:%s792]
                %829 = vst [vmem:[%s803 + $0x60] sm:%s792] %v828
                %s830 = sadd.s32 1, %s801
                %p831 = scmp.ge.s32.totalorder %s830, %s793
                %s832 = scalar_select %p831, 0, %s830
                %s833 = smul.u32 %s832, 104
                %s834 = smul.u32 %s832, 104
                %s835 = scalar_lea.vmem %s772, %s833 [#allocation9]
                %s836 = scalar_lea.vmem %s783, %s834
              $region85: #{generator_toy_forward.1} parent=79 // loop_footer
                %s798 = sadd.s32 %s796, 1
              $region86: #{generator_toy_forward.1} parent=79 // loop_footer_branch
                %795 = sbr.rel target = $region82
              $region87: #{generator_toy_forward.1} parent=79 // loop_exit
                _
              %s837 = sdiv.u32.pop %s779, 13
              %s838 = srem.u32.pop %s779, 13
              %s839 = smul.u32 %s837, 13
              %s840 = smul.u32 8, %s839
              %s841 = scalar_lea.vmem %s772, %s840 [#allocation9]
              %s842 = smul.u32 8, %s839
              %s843 = scalar_lea.vmem %s783, %s842
              // While loop
              $region88: #{generator_toy_forward.1} parent=79 // loop_pre_header
                _
              $region89: #{generator_toy_forward.1} parent=79 // loop_header
                %s845 = sphi 0, %s847
                %p846 = scmp.ge.s32.totalorder %s845, %s838
                %s850 = sphi 0, %s857
                %s851 = sphi %s841, %s860
                %s852 = sphi %s843, %s861
              $region90: #{generator_toy_forward.1} parent=79 // loop_header_branch
                %849 = sbr.rel (%p846) target = $region94
              $region91: #{generator_toy_forward.1} parent=79 // loop_body
                %v853 = vld [vmem:[%s851] sm:%s792]
                %854 = vst [vmem:[%s852] sm:%s792] %v853
                %s855 = sadd.s32 1, %s850
                %p856 = scmp.ge.s32.totalorder %s855, %s838
                %s857 = scalar_select %p856, 0, %s855
                %s858 = smul.u32 %s857, 8
                %s859 = smul.u32 %s857, 8
                %s860 = scalar_lea.vmem %s841, %s858 [#allocation9]
                %s861 = scalar_lea.vmem %s843, %s859
              $region92: #{generator_toy_forward.1} parent=79 // loop_footer
                %s847 = sadd.s32 %s845, 1
              $region93: #{generator_toy_forward.1} parent=79 // loop_footer_branch
                %844 = sbr.rel target = $region89
              $region94: #{generator_toy_forward.1} parent=79 // loop_exit
                _
            $region80: #{generator_toy_forward.1} parent=71 // pred_fallthru
              _
          $region72: #{generator_toy_forward.1} parent=67 // pred_fallthru
            _
          %935 = vnop
        $region68: #{generator_toy_forward.1} parent=47 // pred_fallthru
          _
      $region48: #{generator_toy_forward.1} parent=5 // pred_fallthru
        _
      %p936 = scmp.le.s32.totalorder 2, %s18
      // Predicated region
      $region117: #{generator_toy_forward.1} parent=5 // pred_check
        %p937 = pneg %p936
      $region118: #{generator_toy_forward.1} parent=5 // pred_check_branch
        %939 = sbr.rel (%p937) target = $region120
      $region119: #{generator_toy_forward.1} parent=5 // pred_region
        %s940 = ssub.s32 %s18, 2
        // Predicated region
        $region121: #{generator_toy_forward.1} parent=119 // pred_check
          %p941 = pneg %p199
        $region122: #{generator_toy_forward.1} parent=119 // pred_check_branch
          %943 = sbr.rel (%p941) target = $region124
        $region123: #{generator_toy_forward.1} parent=119 // pred_region
          %s944 = sand.u32 %s184, 1
          %s945 = sand.u32 %s184, 1
          %s946 = smul.addr %s945, 104
          %s947 = scalar_lea.vmem [#allocation9], %s946
        $region124: #{generator_toy_forward.1} parent=119 // pred_fallthru
          _
      $region120: #{generator_toy_forward.1} parent=5 // pred_fallthru
        _
    $region6: #{generator_toy_forward.1} parent=1 // loop_footer
      %s22 = sadd.s32 1, %s18
    $region7: #{generator_toy_forward.1} parent=1 // loop_footer_branch
      %17 = sbr.rel target = $region3
    $region8: #{generator_toy_forward.1} parent=1 // loop_exit
      _
    %948 = vsyncpa [#allocation3], 1
    %s949 = scalar_lea.sflag [#allocation3], 1
    %950 = vsyncpa %s949, 1
    %951 = vsyncpa [#allocation5], 1
    %952 = vsyncpa [#allocation8], 1

</llo_original>
